<compile_context>
chip_gen: v7x
topology: tpu7x:2x2x1
jax: 0.10.0
libtpu: 0.0.40
codegen_flags: <defaults>
</compile_context>

<pallas_src>
import functools
import math

import jax
import jax.numpy as jnp
from jax.experimental import pallas as pl
from jax.experimental.pallas import tpu as pltpu

MIN_LOG_STD = -6.0
MAX_LOG_STD = 0.0
_HALF_LOG_2PI = 0.5 * math.log(2.0 * math.pi)

_LANE = 128          # lane width: the batch tile must be a multiple of this
_SUBLANE = 8         # sublane granularity for feature dims
_TARGET_TB = 2048    # ~2048-lane batch tiles keep per-step overhead negligible


def _round_up(x, m):
    return ((x + m - 1) // m) * m


def _choose_batch_tiling(batch):
    """Pick (tile_lanes, num_blocks) for the batch (lane) axis."""
    b_lanes = _round_up(max(int(batch), 1), _LANE)
    if b_lanes <= _LANE:
        return b_lanes, 1
    # >= 2 blocks so the "parallel" batch axis can shard across v7x's 2 TensorCores
    # (costs a single ~0.35us extra step on single-core v5e/v6e); cap the tile near
    # _TARGET_TB so per-step overhead amortizes while pad waste stays <= 128 lanes/block.
    num_blocks = max(2, pl.cdiv(b_lanes, _TARGET_TB))
    tb = _round_up(pl.cdiv(b_lanes, num_blocks), _LANE)
    num_blocks = pl.cdiv(b_lanes, tb)
    return tb, num_blocks


def _pad2d(a, rows, cols, value=0.0):
    return jnp.pad(a, ((0, rows - a.shape[0]), (0, cols - a.shape[1])),
                   constant_values=value)


def _mu_from_obs(obs, w1, b1, w2, b2, wm, bm, act_limit):
    """Transposed trunk: obs is (d_obs, TB); weights are torch-layout (out, in)."""
    h1 = jnp.dot(w1, obs, preferred_element_type=jnp.float32) + b1
    h1 = jnp.maximum(h1, 0.0)
    h2 = jnp.dot(w2, h1, preferred_element_type=jnp.float32) + b2
    h2 = jnp.maximum(h2, 0.0)
    mu = jnp.dot(wm, h2, preferred_element_type=jnp.float32) + bm
    return jnp.tanh(mu) * act_limit


def _actor_kernel_stoch(obs_ref, eps_ref, w1_ref, b1_ref, w2_ref, b2_ref,
                        wm_ref, bm_ref, std_ref, c_ref, pi_ref, logp_ref,
                        *, act_limit):
    mu = _mu_from_obs(obs_ref[...], w1_ref[...], b1_ref[...], w2_ref[...],
                      b2_ref[...], wm_ref[...], bm_ref[...], act_limit)
    eps = eps_ref[...]                                   # (d_act_p, TB), lane-dense
    pi_ref[...] = mu + std_ref[...] * eps                # dense, unmasked store
    # (pi - mu)/std == eps exactly, so Normal.log_prob collapses to constant - 0.5*sum(eps^2):
    # a cheap sublane reduce over the (<=8-row) action axis, stored lane-dense as (1, TB).
    logp_ref[...] = c_ref[0] - 0.5 * jnp.sum(eps * eps, axis=0, keepdims=True)


def _actor_kernel_det(obs_ref, w1_ref, b1_ref, w2_ref, b2_ref,
                      wm_ref, bm_ref, pi_ref, *, act_limit):
    pi_ref[...] = _mu_from_obs(obs_ref[...], w1_ref[...], b1_ref[...], w2_ref[...],
                               b2_ref[...], wm_ref[...], bm_ref[...], act_limit)


def awac_actor_forward(obs, eps, params, act_limit, deterministic=False,
                       with_logprob=True):
    """obs: (B, d_obs) f32. eps: (B, d_act) f32 standard-normal noise (ignored if deterministic).

    Weights use torch layout (out_features, in_features); biases / log_std_logits are 1-D.
    Returns (pi_action (B, d_act), logp_pi (B,) or None).
    """
    obs = jnp.asarray(obs, jnp.float32)
    B, d_obs = obs.shape
    h1 = params["w1"].shape[0]
    h2 = params["w2"].shape[0]
    d_act = params["wm"].shape[0]

    d_obs_p = _round_up(d_obs, _SUBLANE)
    h1_p = _round_up(h1, _SUBLANE)
    h2_p = _round_up(h2, _SUBLANE)
    d_act_p = _round_up(d_act, _SUBLANE)

    tb, num_blocks = _choose_batch_tiling(B)
    padded_B = tb * num_blocks

    # Weights kept in torch (out, in) layout; zero-pad feature dims to sublane multiples
    # (zero rows/cols are algebraic no-ops through the relu/tanh trunk).
    w1 = _pad2d(jnp.asarray(params["w1"], jnp.float32), h1_p, d_obs_p)
    b1 = _pad2d(jnp.asarray(params["b1"], jnp.float32).reshape(-1, 1), h1_p, 1)
    w2 = _pad2d(jnp.asarray(params["w2"], jnp.float32), h2_p, h1_p)
    b2 = _pad2d(jnp.asarray(params["b2"], jnp.float32).reshape(-1, 1), h2_p, 1)
    wm = _pad2d(jnp.asarray(params["wm"], jnp.float32), d_act_p, h2_p)
    bm = _pad2d(jnp.asarray(params["bm"], jnp.float32).reshape(-1, 1), d_act_p, 1)

    # Hoisted state-independent pieces: sigmoid/exp computed once, not per grid step.
    log_std = MIN_LOG_STD + jax.nn.sigmoid(
        jnp.asarray(params["log_std_logits"], jnp.float32)) * (MAX_LOG_STD - MIN_LOG_STD)
    std = jnp.exp(log_std)                                         # (d_act,)
    logp_const = -(jnp.sum(log_std) + d_act * _HALF_LOG_2PI)       # scalar

    # Transposed, padded activations: features on sublanes, batch on lanes (lane-dense).
    # TODO(synk): in a full RL pipeline, keep obs/eps in this (feature, batch) layout
    # end-to-end instead of transposing at the kernel boundary.
    obs_t = _pad2d(obs.T, d_obs_p, padded_B)

    def _const_spec(a):
        return pl.BlockSpec(a.shape, lambda i: (0, 0))

    weight_args = (w1, b1, w2, b2, wm, bm)
    weight_specs = [_const_spec(a) for a in weight_args]

    obs_spec = pl.BlockSpec((d_obs_p, tb), lambda i: (0, i))
    pi_spec = pl.BlockSpec((d_act_p, tb), lambda i: (0, i))

    flops = 2 * padded_B * (d_obs_p * h1_p + h1_p * h2_p + h2_p * d_act_p)
    common_bytes = 4 * (int(obs_t.size) + sum(int(a.size) for a in weight_args)
                        + d_act_p * padded_B)

    compiler_params = pltpu.CompilerParams(
        dimension_semantics=("parallel",),
        vmem_limit_bytes=32 * 1024 * 1024,   # headroom above v5e's 16 MiB scoped default
    )

    if deterministic:
        kernel = functools.partial(_actor_kernel_det, act_limit=float(act_limit))
        cost = pl.CostEstimate(flops=flops,
                               transcendentals=padded_B * d_act_p,
                               bytes_accessed=common_bytes)
        pi_t = pl.pallas_call(
            kernel,
            out_shape=jax.ShapeDtypeStruct((d_act_p, padded_B), jnp.float32),
            grid=(num_blocks,),
            in_specs=[obs_spec] + weight_specs,
            out_specs=pi_spec,
            compiler_params=compiler_params,
            cost_estimate=cost,
        )(obs_t, *weight_args)
        pi_action = pi_t[:d_act, :B].T
        logp_pi = jnp.full((B,), logp_const, jnp.float32) if with_logprob else None
        return pi_action, logp_pi

    eps = jnp.asarray(eps, jnp.float32)
    eps_t = _pad2d(eps.T, d_act_p, padded_B)
    std_col = _pad2d(std.reshape(-1, 1), d_act_p, 1, value=1.0)
    c_arr = logp_const.reshape(1).astype(jnp.float32)

    eps_spec = pl.BlockSpec((d_act_p, tb), lambda i: (0, i))
    logp_spec = pl.BlockSpec((1, tb), lambda i: (0, i))

    kernel = functools.partial(_actor_kernel_stoch, act_limit=float(act_limit))
    cost = pl.CostEstimate(
        flops=flops + 6 * padded_B * d_act_p,
        transcendentals=padded_B * d_act_p,
        bytes_accessed=common_bytes + 4 * (int(eps_t.size) + d_act_p + 1 + padded_B),
    )

    pi_t, logp_row = pl.pallas_call(
        kernel,
        out_shape=(jax.ShapeDtypeStruct((d_act_p, padded_B), jnp.float32),
                   jax.ShapeDtypeStruct((1, padded_B), jnp.float32)),
        grid=(num_blocks,),
        in_specs=([obs_spec, eps_spec] + weight_specs
                  + [_const_spec(std_col),
                     pl.BlockSpec(memory_space=pltpu.MemorySpace.SMEM)]),
        out_specs=(pi_spec, logp_spec),
        compiler_params=compiler_params,
        cost_estimate=cost,
    )(obs_t, eps_t, *weight_args, std_col, c_arr)

    pi_action = pi_t[:d_act, :B].T
    logp_pi = logp_row[0, :B] if with_logprob else None
    return pi_action, logp_pi


def init_params(key, d_obs, d_act, hidden_sizes):
    """nn.Linear-style uniform init with torch (out, in) weight layout; log_std_logits = zeros."""
    h1, h2 = hidden_sizes

    def linear(k, fan_in, fan_out):
        kw, kb = jax.random.split(k)
        bound = 1.0 / math.sqrt(float(fan_in))
        w = jax.random.uniform(kw, (fan_out, fan_in), jnp.float32, -bound, bound)
        b = jax.random.uniform(kb, (fan_out,), jnp.float32, -bound, bound)
        return w, b

    k1, k2, k3 = jax.random.split(key, 3)
    w1, b1 = linear(k1, d_obs, h1)
    w2, b2 = linear(k2, h1, h2)
    wm, bm = linear(k3, h2, d_act)
    return {"w1": w1, "b1": b1, "w2": w2, "b2": b2, "wm": wm, "bm": bm,
            "log_std_logits": jnp.zeros((d_act,), jnp.float32)}


def _reference_forward(obs, eps, p, act_limit, deterministic=False):
    h1 = jnp.maximum(obs @ p["w1"].T + p["b1"], 0.0)
    h2 = jnp.maximum(h1 @ p["w2"].T + p["b2"], 0.0)
    mu = jnp.tanh(h2 @ p["wm"].T + p["bm"]) * act_limit
    log_std = MIN_LOG_STD + jax.nn.sigmoid(p["log_std_logits"]) * (MAX_LOG_STD - MIN_LOG_STD)
    std = jnp.exp(log_std)
    pi = mu if deterministic else mu + std * eps
    logp = jnp.sum(-0.5 * ((pi - mu) / std) ** 2 - log_std - _HALF_LOG_2PI, axis=-1)
    return pi, logp


if __name__ == "__main__":
    # Small shapes consistent with the module: obs_dim=16, act_dim=8, hidden_sizes=(32, 32), batch=2.
    B, D_OBS, D_ACT, HIDDEN = 2, 16, 8, (32, 32)
    ACT_LIMIT = 1.0

    key = jax.random.PRNGKey(0)
    k_obs, k_eps, k_params = jax.random.split(key, 3)

    obs = jax.random.normal(k_obs, (B, D_OBS), jnp.float32)
    # TODO(synk): torch.distributions.Normal.rsample uses torch RNG; here the standard-normal
    # noise is drawn with JAX RNG outside the kernel and the reparameterization is done in-kernel.
    eps = jax.random.normal(k_eps, (B, D_ACT), jnp.float32)
    params = init_params(k_params, D_OBS, D_ACT, HIDDEN)

    # Stochastic path (deterministic=False, with_logprob=True).
    pi_action, logp_pi = awac_actor_forward(obs, eps, params, ACT_LIMIT)
    jax.block_until_ready((pi_action, logp_pi))
    ref_pi, ref_logp = _reference_forward(obs, eps, params, ACT_LIMIT)
    assert pi_action.shape == (B, D_ACT) and logp_pi.shape == (B,)
    assert jnp.allclose(pi_action, ref_pi, atol=1e-5, rtol=1e-5)
    assert jnp.allclose(logp_pi, ref_logp, atol=1e-5, rtol=1e-5)

    # Deterministic path (pi == tanh-squashed mu; logp is the batch-independent constant).
    pi_det, logp_det = awac_actor_forward(obs, None, params, ACT_LIMIT, deterministic=True)
    jax.block_until_ready((pi_det, logp_det))
    ref_pi_det, ref_logp_det = _reference_forward(obs, jnp.zeros((B, D_ACT), jnp.float32),
                                                  params, ACT_LIMIT, deterministic=True)
    assert jnp.allclose(pi_det, ref_pi_det, atol=1e-5, rtol=1e-5)
    assert jnp.allclose(logp_det, ref_logp_det, atol=1e-5, rtol=1e-5)
    assert bool(jnp.all(jnp.abs(pi_det) <= ACT_LIMIT + 1e-6))

    # Larger ragged batch exercises the multi-block (2-tile) batch grid.
    B2 = 600
    k_obs2, k_eps2 = jax.random.split(jax.random.PRNGKey(1))
    obs2 = jax.random.normal(k_obs2, (B2, D_OBS), jnp.float32)
    eps2 = jax.random.normal(k_eps2, (B2, D_ACT), jnp.float32)
    pi2, logp2 = awac_actor_forward(obs2, eps2, params, ACT_LIMIT)
    jax.block_until_ready((pi2, logp2))
    ref_pi2, ref_logp2 = _reference_forward(obs2, eps2, params, ACT_LIMIT)
    assert pi2.shape == (B2, D_ACT) and logp2.shape == (B2,)
    assert jnp.allclose(pi2, ref_pi2, atol=1e-5, rtol=1e-5)
    assert jnp.allclose(logp2, ref_logp2, atol=1e-5, rtol=1e-5)

    # with_logprob=False path.
    pi3, logp3 = awac_actor_forward(obs, eps, params, ACT_LIMIT, with_logprob=False)
    jax.block_until_ready(pi3)
    assert logp3 is None and jnp.allclose(pi3, ref_pi, atol=1e-5, rtol=1e-5)

    print("KERNEL_OK")
</pallas_src>

<mosaic_0001>
module attributes {stable_mosaic.version = 11 : i64} {
  func.func @_actor_kernel_stoch(%arg0: i32, %arg1: memref<16x128xf32, #tpu.memory_space<vmem>>, %arg2: memref<8x128xf32, #tpu.memory_space<vmem>>, %arg3: memref<32x16xf32, #tpu.memory_space<vmem>>, %arg4: memref<32x1xf32, #tpu.memory_space<vmem>>, %arg5: memref<32x32xf32, #tpu.memory_space<vmem>>, %arg6: memref<32x1xf32, #tpu.memory_space<vmem>>, %arg7: memref<8x32xf32, #tpu.memory_space<vmem>>, %arg8: memref<8x1xf32, #tpu.memory_space<vmem>>, %arg9: memref<8x1xf32, #tpu.memory_space<vmem>>, %arg10: memref<1xf32, #tpu.memory_space<smem>>, %arg11: memref<8x128xf32, #tpu.memory_space<vmem>>, %arg12: memref<1x128xf32, #tpu.memory_space<vmem>>) attributes {dimension_semantics = [#tpu.dimension_semantics<parallel>], iteration_bounds = array<i64: 1>, scalar_prefetch = 0 : i64, scratch_operands = 0 : i64, tpu.core_type = #tpu.core_type<tc>, window_params = [{transform_indices = @transform_0, window_bounds = array<i64: 16, 128>}, {transform_indices = @transform_1, window_bounds = array<i64: 8, 128>}, {pipeline_mode = #tpu.pipeline_mode<synchronous>, transform_indices = @transform_2, window_bounds = array<i64: 32, 16>}, {pipeline_mode = #tpu.pipeline_mode<synchronous>, transform_indices = @transform_3, window_bounds = array<i64: 32, 1>}, {pipeline_mode = #tpu.pipeline_mode<synchronous>, transform_indices = @transform_4, window_bounds = array<i64: 32, 32>}, {pipeline_mode = #tpu.pipeline_mode<synchronous>, transform_indices = @transform_5, window_bounds = array<i64: 32, 1>}, {pipeline_mode = #tpu.pipeline_mode<synchronous>, transform_indices = @transform_6, window_bounds = array<i64: 8, 32>}, {pipeline_mode = #tpu.pipeline_mode<synchronous>, transform_indices = @transform_7, window_bounds = array<i64: 8, 1>}, {pipeline_mode = #tpu.pipeline_mode<synchronous>, transform_indices = @transform_8, window_bounds = array<i64: 8, 1>}, {transform_indices = @transform_9, window_bounds = array<i64: 1>}, {transform_indices = @transform_10, window_bounds = array<i64: 8, 128>}, {transform_indices = @transform_11, window_bounds = array<i64: 1, 128>}]} {
    %c0 = arith.constant 0 : index
    %c0_0 = arith.constant 0 : index
    %0 = vector.load %arg1[%c0, %c0_0] : memref<16x128xf32, #tpu.memory_space<vmem>>, vector<16x128xf32>
    %c0_1 = arith.constant 0 : index
    %c0_2 = arith.constant 0 : index
    %1 = vector.load %arg3[%c0_1, %c0_2] : memref<32x16xf32, #tpu.memory_space<vmem>>, vector<32x16xf32>
    %c0_3 = arith.constant 0 : index
    %c0_4 = arith.constant 0 : index
    %2 = vector.load %arg4[%c0_3, %c0_4] : memref<32x1xf32, #tpu.memory_space<vmem>>, vector<32x1xf32>
    %c0_5 = arith.constant 0 : index
    %c0_6 = arith.constant 0 : index
    %3 = vector.load %arg5[%c0_5, %c0_6] : memref<32x32xf32, #tpu.memory_space<vmem>>, vector<32x32xf32>
    %c0_7 = arith.constant 0 : index
    %c0_8 = arith.constant 0 : index
    %4 = vector.load %arg6[%c0_7, %c0_8] : memref<32x1xf32, #tpu.memory_space<vmem>>, vector<32x1xf32>
    %c0_9 = arith.constant 0 : index
    %c0_10 = arith.constant 0 : index
    %5 = vector.load %arg7[%c0_9, %c0_10] : memref<8x32xf32, #tpu.memory_space<vmem>>, vector<8x32xf32>
    %c0_11 = arith.constant 0 : index
    %c0_12 = arith.constant 0 : index
    %6 = vector.load %arg8[%c0_11, %c0_12] : memref<8x1xf32, #tpu.memory_space<vmem>>, vector<8x1xf32>
    %cst = arith.constant dense<0.000000e+00> : vector<32x128xf32>
    %7 = tpu.matmul %1, %0, %cst {dimension_numbers = #tpu.dot_dimension_numbers<[1], [0], [0], [1], [0, 0, 1, 1], [], []>} : vector<32x16xf32>, vector<16x128xf32>, vector<32x128xf32> -> vector<32x128xf32>
    %8 = vector.broadcast %2 : vector<32x1xf32> to vector<32x128xf32>
    %9 = arith.addf %7, %8 : vector<32x128xf32>
    %cst_13 = arith.constant 0.000000e+00 : f32
    %10 = vector.broadcast %cst_13 : f32 to vector<32x128xf32>
    %11 = arith.maximumf %9, %10 : vector<32x128xf32>
    %cst_14 = arith.constant dense<0.000000e+00> : vector<32x128xf32>
    %12 = tpu.matmul %3, %11, %cst_14 {dimension_numbers = #tpu.dot_dimension_numbers<[1], [0], [0], [1], [0, 0, 1, 1], [], []>} : vector<32x32xf32>, vector<32x128xf32>, vector<32x128xf32> -> vector<32x128xf32>
    %13 = vector.broadcast %4 : vector<32x1xf32> to vector<32x128xf32>
    %14 = arith.addf %12, %13 : vector<32x128xf32>
    %cst_15 = arith.constant 0.000000e+00 : f32
    %15 = vector.broadcast %cst_15 : f32 to vector<32x128xf32>
    %16 = arith.maximumf %14, %15 : vector<32x128xf32>
    %cst_16 = arith.constant dense<0.000000e+00> : vector<8x128xf32>
    %17 = tpu.matmul %5, %16, %cst_16 {dimension_numbers = #tpu.dot_dimension_numbers<[1], [0], [0], [1], [0, 0, 1, 1], [], []>} : vector<8x32xf32>, vector<32x128xf32>, vector<8x128xf32> -> vector<8x128xf32>
    %18 = vector.broadcast %6 : vector<8x1xf32> to vector<8x128xf32>
    %19 = arith.addf %17, %18 : vector<8x128xf32>
    %20 = math.tanh %19 : vector<8x128xf32>
    %cst_17 = arith.constant 1.000000e+00 : f32
    %21 = vector.broadcast %cst_17 : f32 to vector<8x128xf32>
    %22 = arith.mulf %20, %21 : vector<8x128xf32>
    %c0_18 = arith.constant 0 : index
    %c0_19 = arith.constant 0 : index
    %23 = vector.load %arg2[%c0_18, %c0_19] : memref<8x128xf32, #tpu.memory_space<vmem>>, vector<8x128xf32>
    %c0_20 = arith.constant 0 : index
    %c0_21 = arith.constant 0 : index
    %24 = vector.load %arg9[%c0_20, %c0_21] : memref<8x1xf32, #tpu.memory_space<vmem>>, vector<8x1xf32>
    %25 = vector.broadcast %24 : vector<8x1xf32> to vector<8x128xf32>
    %26 = arith.mulf %25, %23 : vector<8x128xf32>
    %27 = arith.addf %22, %26 : vector<8x128xf32>
    %c0_22 = arith.constant 0 : index
    %c0_23 = arith.constant 0 : index
    %28 = vector.load %arg11[%c0_22, %c0_23] : memref<8x128xf32, #tpu.memory_space<vmem>>, vector<8x128xf32>
    tpu.vector_store %arg11[%c0_22, %c0_23], %27 {strides = array<i32>} : memref<8x128xf32, #tpu.memory_space<vmem>>, vector<8x128xf32>,
    %c0_24 = arith.constant 0 : index
    %29 = memref.load %arg10[%c0_24] : memref<1xf32, #tpu.memory_space<smem>>
    %30 = arith.mulf %23, %23 : vector<8x128xf32>
    %cst_25 = arith.constant dense<0.000000e+00> : vector<128xf32>
    %31 = vector.multi_reduction <add>, %30, %cst_25 [0] : vector<8x128xf32> to vector<128xf32>
    %32 = vector.shape_cast %31 : vector<128xf32> to vector<1x128xf32>
    %cst_26 = arith.constant 5.000000e-01 : f32
    %33 = vector.broadcast %cst_26 : f32 to vector<1x128xf32>
    %34 = arith.mulf %33, %32 : vector<1x128xf32>
    %35 = vector.broadcast %29 : f32 to vector<1x128xf32>
    %36 = arith.subf %35, %34 : vector<1x128xf32>
    %c0_27 = arith.constant 0 : index
    %c0_28 = arith.constant 0 : index
    %37 = vector.load %arg12[%c0_27, %c0_28] : memref<1x128xf32, #tpu.memory_space<vmem>>, vector<1x128xf32>
    tpu.vector_store %arg12[%c0_27, %c0_28], %36 {strides = array<i32>} : memref<1x128xf32, #tpu.memory_space<vmem>>, vector<1x128xf32>,
    return
  }
  func.func @transform_0(%arg0: i32) -> (i32, i32) {
    %c0_i32 = arith.constant 0 : i32
    %c0_i32_0 = arith.constant 0 : i32
    return %c0_i32, %arg0 : i32, i32
  }
  func.func @transform_1(%arg0: i32) -> (i32, i32) {
    %c0_i32 = arith.constant 0 : i32
    %c0_i32_0 = arith.constant 0 : i32
    return %c0_i32, %arg0 : i32, i32
  }
  func.func @transform_2(%arg0: i32) -> (i32, i32) {
    %c0_i32 = arith.constant 0 : i32
    %c0_i32_0 = arith.constant 0 : i32
    %c0_i32_1 = arith.constant 0 : i32
    return %c0_i32, %c0_i32_0 : i32, i32
  }
  func.func @transform_3(%arg0: i32) -> (i32, i32) {
    %c0_i32 = arith.constant 0 : i32
    %c0_i32_0 = arith.constant 0 : i32
    %c0_i32_1 = arith.constant 0 : i32
    return %c0_i32, %c0_i32_0 : i32, i32
  }
  func.func @transform_4(%arg0: i32) -> (i32, i32) {
    %c0_i32 = arith.constant 0 : i32
    %c0_i32_0 = arith.constant 0 : i32
    %c0_i32_1 = arith.constant 0 : i32
    return %c0_i32, %c0_i32_0 : i32, i32
  }
  func.func @transform_5(%arg0: i32) -> (i32, i32) {
    %c0_i32 = arith.constant 0 : i32
    %c0_i32_0 = arith.constant 0 : i32
    %c0_i32_1 = arith.constant 0 : i32
    return %c0_i32, %c0_i32_0 : i32, i32
  }
  func.func @transform_6(%arg0: i32) -> (i32, i32) {
    %c0_i32 = arith.constant 0 : i32
    %c0_i32_0 = arith.constant 0 : i32
    %c0_i32_1 = arith.constant 0 : i32
    return %c0_i32, %c0_i32_0 : i32, i32
  }
  func.func @transform_7(%arg0: i32) -> (i32, i32) {
    %c0_i32 = arith.constant 0 : i32
    %c0_i32_0 = arith.constant 0 : i32
    %c0_i32_1 = arith.constant 0 : i32
    return %c0_i32, %c0_i32_0 : i32, i32
  }
  func.func @transform_8(%arg0: i32) -> (i32, i32) {
    %c0_i32 = arith.constant 0 : i32
    %c0_i32_0 = arith.constant 0 : i32
    %c0_i32_1 = arith.constant 0 : i32
    return %c0_i32, %c0_i32_0 : i32, i32
  }
  func.func @transform_9(%arg0: i32) -> i32 {
    %c0_i32 = arith.constant 0 : i32
    %c0_i32_0 = arith.constant 0 : i32
    return %c0_i32 : i32
  }
  func.func @transform_10(%arg0: i32) -> (i32, i32) {
    %c0_i32 = arith.constant 0 : i32
    %c0_i32_0 = arith.constant 0 : i32
    return %c0_i32, %arg0 : i32, i32
  }
  func.func @transform_11(%arg0: i32) -> (i32, i32) {
    %c0_i32 = arith.constant 0 : i32
    %c0_i32_0 = arith.constant 0 : i32
    return %c0_i32, %arg0 : i32, i32
  }
}

</mosaic_0001>

<llo_original>
// kernel: tpu_custom_call.1
$region0: #{tpu_custom_call.1}
  #allocation0 [shape = 'u32[]', space=smem, size = 0x4, offset = 0x4, fixed_abs, tag = 'smem constant byte address 0x4 - core index']
  #allocation1 [shape = 'u32[144,128]{1,0:T(1,128)}', space=vmem, size = 0x12000, scoped, tag = 'internal scratch']
  #allocation2 [shape = 'f32[1]{0:T(128)S(6)}', space=smem, size = 0x200, scoped, tag = 'scoped memory for tpu_custom_call.1']
  %s0 = inlined_call_operand.vmem [shape: f32[16,128], index: 0, kind: input, shape index: {}]
  %s1 = inlined_call_operand.vmem [shape: f32[8,128], index: 1, kind: input, shape index: {}]
  %s2 = inlined_call_operand.vmem [shape: f32[32,16], index: 2, kind: input, shape index: {}]
  %s3 = inlined_call_operand.vmem [shape: f32[32,1], index: 3, kind: input, shape index: {}]
  %s4 = inlined_call_operand.vmem [shape: f32[32,32], index: 4, kind: input, shape index: {}]
  %s5 = inlined_call_operand.vmem [shape: f32[32,1], index: 5, kind: input, shape index: {}]
  %s6 = inlined_call_operand.vmem [shape: f32[8,32], index: 6, kind: input, shape index: {}]
  %s7 = inlined_call_operand.vmem [shape: f32[8,1], index: 7, kind: input, shape index: {}]
  %s8 = inlined_call_operand.vmem [shape: f32[8,1], index: 8, kind: input, shape index: {}]
  %s9 = inlined_call_operand.<no memory space> [shape: f32[1], index: 9, kind: input, shape index: {}]
  %s10 = inlined_call_operand.hbm [shape: f32[8,128], index: 10, kind: output, shape index: {0}]
  %s11 = inlined_call_operand.hbm [shape: f32[1,128], index: 11, kind: output, shape index: {1}]
  %12 = xla_tuple %s10, %s11
  %s13 = sld [smem:[#allocation0]]
  $region58: #{tpu_custom_call.1} parent=0
    _
  %s15 = ssub.s32 1, %s13
  %s16 = scalar_select 0, %s15, %s13
  %17 = sst [smem:[#allocation2]] %s9
  $region1: #{tpu_custom_call.1} parent=0
    #allocation3 [shape = 'u8[4096]{0}', space=vmem, size = 0x1000, scoped, tag = 'output window, operand 0, single buffered']
    #allocation4 [shape = 's32[1]{0}', space=sflag, size = 0x4, scoped, tag = 'scoped memory for tpu_custom_call.1']
    #allocation5 [shape = 'u8[512]{0}', space=vmem, size = 0x400, scoped, tag = 'output window, operand 1, single buffered']
    #allocation6 [shape = 's32[1]{0}', space=sflag, size = 0x4, scoped, tag = 'scoped memory for tpu_custom_call.1']
    %18 = vsyncpa [#allocation4], 0
    %19 = vsyncpa [#allocation6], 0
    // Predicated region
    $region2: #{tpu_custom_call.1} parent=1 // pred_check
      _
    $region3: #{tpu_custom_call.1} parent=1 // pred_check_branch
      %21 = sbr.rel (0) target = $region5
    $region4: #{tpu_custom_call.1} parent=1 // pred_region
      _
    $region5: #{tpu_custom_call.1} parent=1 // pred_fallthru
      _
    // Predicated region
    $region6: #{tpu_custom_call.1} parent=1 // pred_check
      _
    $region7: #{tpu_custom_call.1} parent=1 // pred_check_branch
      %23 = sbr.rel (0) target = $region9
    $region8: #{tpu_custom_call.1} parent=1 // pred_region
      _
    $region9: #{tpu_custom_call.1} parent=1 // pred_fallthru
      _
    // Predicated region
    $region10: #{tpu_custom_call.1} parent=1 // pred_check
      _
    $region11: #{tpu_custom_call.1} parent=1 // pred_check_branch
      %25 = sbr.rel (0) target = $region13
    $region12: #{tpu_custom_call.1} parent=1 // pred_region
      _
    $region13: #{tpu_custom_call.1} parent=1 // pred_fallthru
      _
    // Predicated region
    $region14: #{tpu_custom_call.1} parent=1 // pred_check
      _
    $region15: #{tpu_custom_call.1} parent=1 // pred_check_branch
      %27 = sbr.rel (0) target = $region17
    $region16: #{tpu_custom_call.1} parent=1 // pred_region
      _
    $region17: #{tpu_custom_call.1} parent=1 // pred_fallthru
      _
    // Predicated region
    $region18: #{tpu_custom_call.1} parent=1 // pred_check
      _
    $region19: #{tpu_custom_call.1} parent=1 // pred_check_branch
      %29 = sbr.rel (0) target = $region21
    $region20: #{tpu_custom_call.1} parent=1 // pred_region
      _
    $region21: #{tpu_custom_call.1} parent=1 // pred_fallthru
      _
    // Predicated region
    $region22: #{tpu_custom_call.1} parent=1 // pred_check
      _
    $region23: #{tpu_custom_call.1} parent=1 // pred_check_branch
      %31 = sbr.rel (0) target = $region25
    $region24: #{tpu_custom_call.1} parent=1 // pred_region
      _
    $region25: #{tpu_custom_call.1} parent=1 // pred_fallthru
      _
    // Predicated region
    $region26: #{tpu_custom_call.1} parent=1 // pred_check
      _
    $region27: #{tpu_custom_call.1} parent=1 // pred_check_branch
      %33 = sbr.rel (0) target = $region29
    $region28: #{tpu_custom_call.1} parent=1 // pred_region
      _
    $region29: #{tpu_custom_call.1} parent=1 // pred_fallthru
      _
    // Predicated region
    $region30: #{tpu_custom_call.1} parent=1 // pred_check
      _
    $region31: #{tpu_custom_call.1} parent=1 // pred_check_branch
      %35 = sbr.rel (0) target = $region33
    $region32: #{tpu_custom_call.1} parent=1 // pred_region
      _
    $region33: #{tpu_custom_call.1} parent=1 // pred_fallthru
      _
    // Predicated region
    $region34: #{tpu_custom_call.1} parent=1 // pred_check
      _
    $region35: #{tpu_custom_call.1} parent=1 // pred_check_branch
      %37 = sbr.rel (0) target = $region37
    $region36: #{tpu_custom_call.1} parent=1 // pred_region
      _
    $region37: #{tpu_custom_call.1} parent=1 // pred_fallthru
      _
    // Predicated region
    $region38: #{tpu_custom_call.1} parent=1 // pred_check
      _
    $region39: #{tpu_custom_call.1} parent=1 // pred_check_branch
      %39 = sbr.rel (0) target = $region41
    $region40: #{tpu_custom_call.1} parent=1 // pred_region
      _
    $region41: #{tpu_custom_call.1} parent=1 // pred_fallthru
      _
    %v40 = vld [vmem:[%s0] sm:$0xff]
    %v41 = vld [vmem:[%s0 + $0x8] sm:$0xff]
    %v42 = vld [vmem:[%s2] sm:$0xff]
    %v43 = vld [vmem:[%s2 + $0x8] sm:$0xff]
    %v44 = vld [vmem:[%s2 + $0x10] sm:$0xff]
    %v45 = vld [vmem:[%s2 + $0x18] sm:$0xff]
    %v46 = vld [vmem:[%s3] sm:$0xff]
    %v47 = vld [vmem:[%s3 + $0x8] sm:$0xff]
    %v48 = vld [vmem:[%s3 + $0x10] sm:$0xff]
    %v49 = vld [vmem:[%s3 + $0x18] sm:$0xff]
    %v50 = vld [vmem:[%s4] sm:$0xff]
    %v51 = vld [vmem:[%s4 + $0x8] sm:$0xff]
    %v52 = vld [vmem:[%s4 + $0x10] sm:$0xff]
    %v53 = vld [vmem:[%s4 + $0x18] sm:$0xff]
    %v54 = vld [vmem:[%s5] sm:$0xff]
    %v55 = vld [vmem:[%s5 + $0x8] sm:$0xff]
    %v56 = vld [vmem:[%s5 + $0x10] sm:$0xff]
    %v57 = vld [vmem:[%s5 + $0x18] sm:$0xff]
    %v58 = vld [vmem:[%s6] sm:$0xff]
    %v59 = vld [vmem:[%s7] sm:$0xff]
    %61 = vset.pattern.permute.xlu0 0
    %62 = vperm.xlu0 %61, %v46
    %v63 = vpop.permute.xlu0 %62
    %66 = vset.pattern.permute.xlu0 0
    %67 = vperm.xlu0 %66, %v47
    %v68 = vpop.permute.xlu0 %67
    %71 = vset.pattern.permute.xlu0 0
    %72 = vperm.xlu0 %71, %v48
    %v73 = vpop.permute.xlu0 %72
    %76 = vset.pattern.permute.xlu0 0
    %77 = vperm.xlu0 %76, %v49
    %v78 = vpop.permute.xlu0 %77
    %vm80 = vcmask 130048
    %v82 = vsel %vm80, %v42, 0
    %v85 = vsel %vm80, %v43, 0
    %v88 = vsel %vm80, %v44, 0
    %v91 = vsel %vm80, %v45, 0
    %93 = vmatprep.subr.mxu0 0.0
    %94 = vmatpush1.msra.mxu0 %v40
    %95 = vmatprep.subr.mxu0 0.0
    %96 = vmatpush1.msra.mxu0 %v41
    %97 = vmatprep.subr.mxu0 0.0
    %98 = vmatpush1.msra.mxu0 0.0
    %99 = vmatprep.subr.mxu0 0.0
    %100 = vmatpush1.msra.mxu0 0.0
    %101 = vmatprep.subr.mxu0 0.0
    %102 = vmatpush1.msra.mxu0 0.0
    %103 = vmatprep.subr.mxu0 0.0
    %104 = vmatpush1.msra.mxu0 0.0
    %105 = vmatprep.subr.mxu0 0.0
    %106 = vmatpush1.msra.mxu0 0.0
    %107 = vmatprep.subr.mxu0 0.0
    %108 = vmatpush1.msra.mxu0 0.0
    %109 = vmatprep.subr.mxu0 0.0
    %110 = vmatpush1.msra.mxu0 0.0
    %111 = vmatprep.subr.mxu0 0.0
    %112 = vmatpush1.msra.mxu0 0.0
    %113 = vmatprep.subr.mxu0 0.0
    %114 = vmatpush1.msra.mxu0 0.0
    %115 = vmatprep.subr.mxu0 0.0
    %116 = vmatpush1.msra.mxu0 0.0
    %117 = vmatprep.subr.mxu0 0.0
    %118 = vmatpush1.msra.mxu0 0.0
    %119 = vmatprep.subr.mxu0 0.0
    %120 = vmatpush1.msra.mxu0 0.0
    %121 = vmatprep.subr.mxu0 0.0
    %122 = vmatpush1.msra.mxu0 0.0
    %123 = vmatprep.subr.mxu0 0.0
    %124 = vmatpush1.msra.mxu0 0.0
    %125 = vmatprep.subr.mxu0 0.0
    %126 = vmatpush1.msra.mxu0 0.0
    %127 = vmatprep.subr.mxu0 0.0
    %128 = vmatpush1.msra.mxu0 0.0
    %129 = vmatprep.subr.mxu0 0.0
    %130 = vmatpush1.msra.mxu0 0.0
    %131 = vmatprep.subr.mxu0 0.0
    %132 = vmatpush1.msra.mxu0 0.0
    %133 = vmatprep.subr.mxu0 0.0
    %134 = vmatpush1.msra.mxu0 0.0
    %135 = vmatprep.subr.mxu0 0.0
    %136 = vmatpush1.msra.mxu0 0.0
    %137 = vmatprep.subr.mxu0 0.0
    %138 = vmatpush1.msra.mxu0 0.0
    %139 = vmatprep.subr.mxu0 0.0
    %140 = vmatpush1.msra.mxu0 0.0
    %141 = vmatprep.subr.mxu0 0.0
    %142 = vmatpush1.msra.mxu0 0.0
    %143 = vmatprep.subr.mxu0 0.0
    %144 = vmatpush1.msra.mxu0 0.0
    %145 = vmatprep.subr.mxu0 0.0
    %146 = vmatpush1.msra.mxu0 0.0
    %147 = vmatprep.subr.mxu0 0.0
    %148 = vmatpush1.msra.mxu0 0.0
    %149 = vmatprep.subr.mxu0 0.0
    %150 = vmatpush1.msra.mxu0 0.0
    %151 = vmatprep.subr.mxu0 0.0
    %152 = vmatpush1.msra.mxu0 0.0
    %153 = vmatprep.subr.mxu0 0.0
    %154 = vmatpush1.msra.mxu0 0.0
    %155 = vmatprep.subr.mxu0 0.0
    %156 = vmatpush1.msra.mxu0 0.0
    %157 = vmatprep.mubr.f32.mxu0 0.0
    %158 = vmatmul.mubr.f32.gmra.mrb[0].mxu0 %v82
    %v159 = vpop.f32.mrb[0].mxu0
    %v160 = vadd.f32 %v63, %v159
    %v161 = vpop.f32.mrb[0].mxu0
    %162 = vmatprep.mubr.f32.mxu0 0.0
    %163 = vmatmul.mubr.f32.gmra.mrb[0].mxu0 %v85
    %v164 = vpop.f32.mrb[0].mxu0
    %v165 = vadd.f32 %v68, %v164
    %v166 = vpop.f32.mrb[0].mxu0
    %167 = vmatprep.mubr.f32.mxu0 0.0
    %168 = vmatmul.mubr.f32.gmra.mrb[0].mxu0 %v88
    %v169 = vpop.f32.mrb[0].mxu0
    %v170 = vadd.f32 %v73, %v169
    %v171 = vpop.f32.mrb[0].mxu0
    %172 = vmatprep.mubr.f32.mxu0 0.0
    %173 = vmatmul.mubr.f32.gmra.mrb[0].mxu0 %v91
    %v174 = vpop.f32.mrb[0].mxu0
    %v175 = vadd.f32 %v78, %v174
    %v176 = vpop.f32.mrb[0].mxu0
    %177 = vdwg.mxu0
    %v178 = vmax.f32 %v160, 0.0
    %v179 = vmax.f32 %v165, 0.0
    %v180 = vmax.f32 %v170, 0.0
    %v181 = vmax.f32 %v175, 0.0
    %183 = vset.pattern.permute.xlu0 0
    %184 = vperm.xlu0 %183, %v54
    %v185 = vpop.permute.xlu0 %184
    %188 = vset.pattern.permute.xlu0 0
    %189 = vperm.xlu0 %188, %v55
    %v190 = vpop.permute.xlu0 %189
    %193 = vset.pattern.permute.xlu0 0
    %194 = vperm.xlu0 %193, %v56
    %v195 = vpop.permute.xlu0 %194
    %198 = vset.pattern.permute.xlu0 0
    %199 = vperm.xlu0 %198, %v57
    %v200 = vpop.permute.xlu0 %199
    %vm202 = vcmask 261120
    %v204 = vsel %vm202, %v50, 0
    %v207 = vsel %vm202, %v51, 0
    %v210 = vsel %vm202, %v52, 0
    %v213 = vsel %vm202, %v53, 0
    %215 = vmatprep.subr.mxu0 0.0
    %216 = vmatpush1.msra.mxu0 %v178
    %217 = vmatprep.subr.mxu0 0.0
    %218 = vmatpush1.msra.mxu0 %v179
    %219 = vmatprep.subr.mxu0 0.0
    %220 = vmatpush1.msra.mxu0 %v180
    %221 = vmatprep.subr.mxu0 0.0
    %222 = vmatpush1.msra.mxu0 %v181
    %223 = vmatprep.subr.mxu0 0.0
    %224 = vmatpush1.msra.mxu0 0.0
    %225 = vmatprep.subr.mxu0 0.0
    %226 = vmatpush1.msra.mxu0 0.0
    %227 = vmatprep.subr.mxu0 0.0
    %228 = vmatpush1.msra.mxu0 0.0
    %229 = vmatprep.subr.mxu0 0.0
    %230 = vmatpush1.msra.mxu0 0.0
    %231 = vmatprep.subr.mxu0 0.0
    %232 = vmatpush1.msra.mxu0 0.0
    %233 = vmatprep.subr.mxu0 0.0
    %234 = vmatpush1.msra.mxu0 0.0
    %235 = vmatprep.subr.mxu0 0.0
    %236 = vmatpush1.msra.mxu0 0.0
    %237 = vmatprep.subr.mxu0 0.0
    %238 = vmatpush1.msra.mxu0 0.0
    %239 = vmatprep.subr.mxu0 0.0
    %240 = vmatpush1.msra.mxu0 0.0
    %241 = vmatprep.subr.mxu0 0.0
    %242 = vmatpush1.msra.mxu0 0.0
    %243 = vmatprep.subr.mxu0 0.0
    %244 = vmatpush1.msra.mxu0 0.0
    %245 = vmatprep.subr.mxu0 0.0
    %246 = vmatpush1.msra.mxu0 0.0
    %247 = vmatprep.subr.mxu0 0.0
    %248 = vmatpush1.msra.mxu0 0.0
    %249 = vmatprep.subr.mxu0 0.0
    %250 = vmatpush1.msra.mxu0 0.0
    %251 = vmatprep.subr.mxu0 0.0
    %252 = vmatpush1.msra.mxu0 0.0
    %253 = vmatprep.subr.mxu0 0.0
    %254 = vmatpush1.msra.mxu0 0.0
    %255 = vmatprep.subr.mxu0 0.0
    %256 = vmatpush1.msra.mxu0 0.0
    %257 = vmatprep.subr.mxu0 0.0
    %258 = vmatpush1.msra.mxu0 0.0
    %259 = vmatprep.subr.mxu0 0.0
    %260 = vmatpush1.msra.mxu0 0.0
    %261 = vmatprep.subr.mxu0 0.0
    %262 = vmatpush1.msra.mxu0 0.0
    %263 = vmatprep.subr.mxu0 0.0
    %264 = vmatpush1.msra.mxu0 0.0
    %265 = vmatprep.subr.mxu0 0.0
    %266 = vmatpush1.msra.mxu0 0.0
    %267 = vmatprep.subr.mxu0 0.0
    %268 = vmatpush1.msra.mxu0 0.0
    %269 = vmatprep.subr.mxu0 0.0
    %270 = vmatpush1.msra.mxu0 0.0
    %271 = vmatprep.subr.mxu0 0.0
    %272 = vmatpush1.msra.mxu0 0.0
    %273 = vmatprep.subr.mxu0 0.0
    %274 = vmatpush1.msra.mxu0 0.0
    %275 = vmatprep.subr.mxu0 0.0
    %276 = vmatpush1.msra.mxu0 0.0
    %277 = vmatprep.subr.mxu0 0.0
    %278 = vmatpush1.msra.mxu0 0.0
    %279 = vmatprep.mubr.f32.mxu0 0.0
    %280 = vmatmul.mubr.f32.gmra.mrb[0].mxu0 %v204
    %v281 = vpop.f32.mrb[0].mxu0
    %v282 = vadd.f32 %v185, %v281
    %v283 = vpop.f32.mrb[0].mxu0
    %284 = vmatprep.mubr.f32.mxu0 0.0
    %285 = vmatmul.mubr.f32.gmra.mrb[0].mxu0 %v207
    %v286 = vpop.f32.mrb[0].mxu0
    %v287 = vadd.f32 %v190, %v286
    %v288 = vpop.f32.mrb[0].mxu0
    %289 = vmatprep.mubr.f32.mxu0 0.0
    %290 = vmatmul.mubr.f32.gmra.mrb[0].mxu0 %v210
    %v291 = vpop.f32.mrb[0].mxu0
    %v292 = vadd.f32 %v195, %v291
    %v293 = vpop.f32.mrb[0].mxu0
    %294 = vmatprep.mubr.f32.mxu0 0.0
    %295 = vmatmul.mubr.f32.gmra.mrb[0].mxu0 %v213
    %v296 = vpop.f32.mrb[0].mxu0
    %v297 = vadd.f32 %v200, %v296
    %v298 = vpop.f32.mrb[0].mxu0
    %299 = vdwg.mxu0
    %v300 = vmax.f32 %v282, 0.0
    %v301 = vmax.f32 %v287, 0.0
    %v302 = vmax.f32 %v292, 0.0
    %v303 = vmax.f32 %v297, 0.0
    %305 = vset.pattern.permute.xlu0 0
    %306 = vperm.xlu0 %305, %v59
    %v307 = vpop.permute.xlu0 %306
    %v310 = vsel %vm202, %v58, 0
    %312 = vmatprep.subr.mxu0 0.0
    %313 = vmatpush1.msra.mxu0 %v300
    %314 = vmatprep.subr.mxu0 0.0
    %315 = vmatpush1.msra.mxu0 %v301
    %316 = vmatprep.subr.mxu0 0.0
    %317 = vmatpush1.msra.mxu0 %v302
    %318 = vmatprep.subr.mxu0 0.0
    %319 = vmatpush1.msra.mxu0 %v303
    %320 = vmatprep.subr.mxu0 0.0
    %321 = vmatpush1.msra.mxu0 0.0
    %322 = vmatprep.subr.mxu0 0.0
    %323 = vmatpush1.msra.mxu0 0.0
    %324 = vmatprep.subr.mxu0 0.0
    %325 = vmatpush1.msra.mxu0 0.0
    %326 = vmatprep.subr.mxu0 0.0
    %327 = vmatpush1.msra.mxu0 0.0
    %328 = vmatprep.subr.mxu0 0.0
    %329 = vmatpush1.msra.mxu0 0.0
    %330 = vmatprep.subr.mxu0 0.0
    %331 = vmatpush1.msra.mxu0 0.0
    %332 = vmatprep.subr.mxu0 0.0
    %333 = vmatpush1.msra.mxu0 0.0
    %334 = vmatprep.subr.mxu0 0.0
    %335 = vmatpush1.msra.mxu0 0.0
    %336 = vmatprep.subr.mxu0 0.0
    %337 = vmatpush1.msra.mxu0 0.0
    %338 = vmatprep.subr.mxu0 0.0
    %339 = vmatpush1.msra.mxu0 0.0
    %340 = vmatprep.subr.mxu0 0.0
    %341 = vmatpush1.msra.mxu0 0.0
    %342 = vmatprep.subr.mxu0 0.0
    %343 = vmatpush1.msra.mxu0 0.0
    %344 = vmatprep.subr.mxu0 0.0
    %345 = vmatpush1.msra.mxu0 0.0
    %346 = vmatprep.subr.mxu0 0.0
    %347 = vmatpush1.msra.mxu0 0.0
    %348 = vmatprep.subr.mxu0 0.0
    %349 = vmatpush1.msra.mxu0 0.0
    %350 = vmatprep.subr.mxu0 0.0
    %351 = vmatpush1.msra.mxu0 0.0
    %352 = vmatprep.subr.mxu0 0.0
    %353 = vmatpush1.msra.mxu0 0.0
    %354 = vmatprep.subr.mxu0 0.0
    %355 = vmatpush1.msra.mxu0 0.0
    %356 = vmatprep.subr.mxu0 0.0
    %357 = vmatpush1.msra.mxu0 0.0
    %358 = vmatprep.subr.mxu0 0.0
    %359 = vmatpush1.msra.mxu0 0.0
    %360 = vmatprep.subr.mxu0 0.0
    %361 = vmatpush1.msra.mxu0 0.0
    %362 = vmatprep.subr.mxu0 0.0
    %363 = vmatpush1.msra.mxu0 0.0
    %364 = vmatprep.subr.mxu0 0.0
    %365 = vmatpush1.msra.mxu0 0.0
    %366 = vmatprep.subr.mxu0 0.0
    %367 = vmatpush1.msra.mxu0 0.0
    %368 = vmatprep.subr.mxu0 0.0
    %369 = vmatpush1.msra.mxu0 0.0
    %370 = vmatprep.subr.mxu0 0.0
    %371 = vmatpush1.msra.mxu0 0.0
    %372 = vmatprep.subr.mxu0 0.0
    %373 = vmatpush1.msra.mxu0 0.0
    %374 = vmatprep.subr.mxu0 0.0
    %375 = vmatpush1.msra.mxu0 0.0
    %376 = vmatprep.mubr.f32.mxu0 0.0
    %377 = vmatmul.mubr.f32.gmra.mrb[0].mxu0 %v310
    %v378 = vpop.f32.mrb[0].mxu0
    %v379 = vadd.f32 %v307, %v378
    %v380 = vpop.f32.mrb[0].mxu0
    %381 = vdwg.mxu0
    %v382 = vtanh.pop %v379
    %v383 = vld [vmem:[%s1] sm:$0xff]
    %v384 = vld [vmem:[%s8] sm:$0xff]
    %386 = vset.pattern.permute.xlu0 0
    %387 = vperm.xlu0 %386, %v384
    %v388 = vpop.permute.xlu0 %387
    %v390 = vmul.f32 %v388, %v383
    %v391 = vadd.f32 %v382, %v390
    %392 = vst [vmem:[#allocation3] sm:$0xff] %v391
    %s393 = sld [smem:[#allocation2]]
    %v394 = vmul.f32 %v383, %v383
    %v395 = vrot.slane %v394, 4
    %v396 = vadd.f32 %v394, %v395
    %v397 = vrot.slane %v396, 2
    %v398 = vadd.f32 %v396, %v397
    %v399 = vrot.slane %v398, 1
    %v400 = vadd.f32 %v398, %v399
    %v401 = vmul.f32 %v400, 0.5
    %v402 = vstv %s393
    %v403 = vsub.f32 %v402, %v401
    %404 = vst [vmem:[#allocation5] sm:$0x1] %v403
    // Predicated region
    $region42: #{tpu_custom_call.1} parent=1 // pred_check
      _
    $region43: #{tpu_custom_call.1} parent=1 // pred_check_branch
      %406 = sbr.rel (0) target = $region45
    $region44: #{tpu_custom_call.1} parent=1 // pred_region
      %s408 = ssub.s32 128, 128
      %409 = vsyncadd [#allocation4], %s408
      %s411 = sshll.u32 [#allocation3], 4
      %s412 = int_to_ptr.vmem [resolvable:$true] %s411
      %414 = dma.vmem_to_hbm [thread:$0]  %s412, 128, %s10, [#allocation4]
    $region45: #{tpu_custom_call.1} parent=1 // pred_fallthru
      _
    // Predicated region
    $region46: #{tpu_custom_call.1} parent=1 // pred_check
      _
    $region47: #{tpu_custom_call.1} parent=1 // pred_check_branch
      %416 = sbr.rel (0) target = $region49
    $region48: #{tpu_custom_call.1} parent=1 // pred_region
      %s418 = ssub.s32 16, 16
      %419 = vsyncadd [#allocation6], %s418
      %s421 = sshll.u32 [#allocation5], 4
      %s422 = int_to_ptr.vmem [resolvable:$true] %s421
      %424 = dma.vmem_to_hbm [thread:$0]  %s422, 16, %s11, [#allocation6]
    $region49: #{tpu_custom_call.1} parent=1 // pred_fallthru
      _
    // Predicated region
    $region50: #{tpu_custom_call.1} parent=1 // pred_check
      _
    $region51: #{tpu_custom_call.1} parent=1 // pred_check_branch
      %426 = sbr.rel (0) target = $region53
    $region52: #{tpu_custom_call.1} parent=1 // pred_region
      %427 = dma.done [#allocation4], 128
    $region53: #{tpu_custom_call.1} parent=1 // pred_fallthru
      _
    // Predicated region
    $region54: #{tpu_custom_call.1} parent=1 // pred_check
      _
    $region55: #{tpu_custom_call.1} parent=1 // pred_check_branch
      %429 = sbr.rel (0) target = $region57
    $region56: #{tpu_custom_call.1} parent=1 // pred_region
      %430 = dma.done [#allocation6], 16
    $region57: #{tpu_custom_call.1} parent=1 // pred_fallthru
      _
    %431 = vsyncpa [#allocation4], 1
    %432 = vsyncpa [#allocation6], 1

</llo_original>
